<compile_context>
chip_gen: v7x
topology: tpu7x:2x2x1
jax: 0.10.0
libtpu: 0.0.40
codegen_flags: <defaults>
</compile_context>

<pallas_src>
import functools

import numpy as np

import jax
import jax.numpy as jnp
from jax.experimental import pallas as pl
from jax.experimental.pallas import tpu as pltpu


def _conv3x3_relu_kernel(x_ref, w_ref, b_ref, m_ref, o_ref, *, H, W):
    # x_ref: (1, Cin, FLAT)  zero-padded, spatially-flattened input (lane-major)
    # w_ref: (Cout, 9*Cin)   weights, tap-major: column = (dy*3 + dx)*Cin + ci
    # b_ref: (Cout, 1)       bias
    # m_ref: (2, H*W)        row 0 kills col j==0 (dx=0 taps); row 1 kills j==W-1 (dx=2)
    # o_ref: (1, Cout, H*W)  lane-dense output (reshapes to NCHW for free)
    HW = H * W

    xf = x_ref[0]                     # (Cin, FLAT)
    mask_l = m_ref[0:1, :]            # (1, HW)
    mask_r = m_ref[1:2, :]            # (1, HW)

    # Build the (9*Cin, H*W) column matrix from 9 contiguous lane slices
    # (static unroll), masking the taps that would read across a row boundary.
    cols = []
    for dy in range(3):
        for dx in range(3):
            off = dy * W + dx
            s = xf[:, off:off + HW]   # (Cin, HW)
            if dx == 0:
                s = s * mask_l
            elif dx == 2:
                s = s * mask_r
            cols.append(s)
    xcol = jnp.concatenate(cols, axis=0)                  # (9*Cin, HW)

    # Single fused MXU matmul: (Cout, 9*Cin) @ (9*Cin, HW) -> (Cout, HW).
    acc = jnp.dot(w_ref[...], xcol, preferred_element_type=jnp.float32)
    acc = acc + b_ref[...]                                # (Cout, 1) lane-broadcast
    acc = jnp.maximum(acc, 0.0)                           # ReLU
    o_ref[...] = acc[None].astype(o_ref.dtype)


def block_forward_nchw(x_nchw, w_oihw, bias):
    """Conv2d(k=3, padding=1) + ReLU.  NCHW in, NCHW out (matches PyTorch Block)."""
    N, Cin, H, W = x_nchw.shape
    Cout = w_oihw.shape[0]
    HW = H * W
    FLAT = HW + 2 * (W + 1)   # enough for the largest tap offset (2W+2) + slice len HW

    # W+1 zeros on each side of the flattened spatial axis play the role of the
    # top/bottom zero-padding rows (plus 1-element slack for the corner taps).
    # Left/right borders are handled by the in-kernel lane masks.
    x_flat = jnp.pad(x_nchw.reshape(N, Cin, HW),
                     ((0, 0), (0, 0), (W + 1, W + 1)))    # (N, Cin, FLAT)

    # (Cout, Cin, 3, 3) -> (Cout, 9*Cin) with column index (dy*3 + dx)*Cin + ci.
    w2d = jnp.transpose(w_oihw, (0, 2, 3, 1)).reshape(Cout, 9 * Cin)
    b2d = bias.reshape(Cout, 1)

    # Border masks: host-side constants (zero runtime cost).
    col = np.arange(HW) % W
    masks = jnp.asarray(
        np.stack([(col != 0), (col != W - 1)]).astype(np.float32))  # (2, HW)

    kernel = functools.partial(_conv3x3_relu_kernel, H=H, W=W)
    out = pl.pallas_call(
        kernel,
        out_shape=jax.ShapeDtypeStruct((N, Cout, HW), x_nchw.dtype),
        grid_spec=pltpu.PrefetchScalarGridSpec(
            num_scalar_prefetch=0,
            grid=(N,),
            in_specs=[
                pl.BlockSpec((1, Cin, FLAT), lambda n: (n, 0, 0)),
                pl.BlockSpec((Cout, 9 * Cin), lambda n: (0, 0)),
                pl.BlockSpec((Cout, 1), lambda n: (0, 0)),
                pl.BlockSpec((2, HW), lambda n: (0, 0)),
            ],
            out_specs=pl.BlockSpec((1, Cout, HW), lambda n: (n, 0, 0)),
        ),
        compiler_params=pltpu.CompilerParams(
            dimension_semantics=("parallel",),
        ),
    )(x_flat, w2d, b2d, masks)

    # (N, Cout, H*W) -> (N, Cout, H, W): contiguous, free reshape (output is NCHW).
    return out.reshape(N, Cout, H, W)


def _reference_nchw(x_nchw, w_oihw, bias):
    y = jax.lax.conv_general_dilated(
        x_nchw, w_oihw,
        window_strides=(1, 1),
        padding=((1, 1), (1, 1)),
        dimension_numbers=("NCHW", "OIHW", "NCHW"),
    )
    y = y + bias.reshape(1, -1, 1, 1)
    return jnp.maximum(y, 0.0)


if __name__ == "__main__":
    # Small shapes consistent with the module: batch=2, inlen=4, outlen=8, 16x16.
    N, Cin, Cout, H, W = 2, 4, 8, 16, 16

    key = jax.random.PRNGKey(0)
    kx, kw, kb = jax.random.split(key, 3)

    x = jax.random.normal(kx, (N, Cin, H, W), dtype=jnp.float32)
    # PyTorch Conv2d parameter shapes: weight (Cout, Cin, 3, 3), bias (Cout,)
    w = jax.random.normal(kw, (Cout, Cin, 3, 3), dtype=jnp.float32) * 0.1
    b = jax.random.normal(kb, (Cout,), dtype=jnp.float32) * 0.1

    fwd = jax.jit(block_forward_nchw)
    y = jax.block_until_ready(fwd(x, w, b))

    y_ref = jax.block_until_ready(_reference_nchw(x, w, b))
    assert y.shape == (N, Cout, H, W)
    assert jnp.allclose(y, y_ref, atol=1e-4, rtol=1e-4)

    print("KERNEL_OK")
</pallas_src>

<mosaic_0001>
module attributes {stable_mosaic.version = 11 : i64} {
  func.func @_conv3x3_relu_kernel(%arg0: i32, %arg1: memref<1x4x290xf32, #tpu.memory_space<vmem>>, %arg2: memref<8x36xf32, #tpu.memory_space<vmem>>, %arg3: memref<8x1xf32, #tpu.memory_space<vmem>>, %arg4: memref<2x256xf32, #tpu.memory_space<vmem>>, %arg5: memref<1x8x256xf32, #tpu.memory_space<vmem>>) attributes {dimension_semantics = [#tpu.dimension_semantics<parallel>], iteration_bounds = array<i64: 2>, scalar_prefetch = 0 : i64, scratch_operands = 0 : i64, tpu.core_type = #tpu.core_type<tc>, window_params = [{transform_indices = @transform_0, window_bounds = array<i64: 1, 4, 290>}, {pipeline_mode = #tpu.pipeline_mode<synchronous>, transform_indices = @transform_1, window_bounds = array<i64: 8, 36>}, {pipeline_mode = #tpu.pipeline_mode<synchronous>, transform_indices = @transform_2, window_bounds = array<i64: 8, 1>}, {pipeline_mode = #tpu.pipeline_mode<synchronous>, transform_indices = @transform_3, window_bounds = array<i64: 2, 256>}, {transform_indices = @transform_4, window_bounds = array<i64: 1, 8, 256>}]} {
    %c0 = arith.constant 0 : index
    %c0_0 = arith.constant 0 : index
    %c0_1 = arith.constant 0 : index
    %0 = vector.load %arg1[%c0, %c0_0, %c0_1] : memref<1x4x290xf32, #tpu.memory_space<vmem>>, vector<1x4x290xf32>
    %1 = vector.shape_cast %0 : vector<1x4x290xf32> to vector<4x290xf32>
    %c0_2 = arith.constant 0 : index
    %c0_3 = arith.constant 0 : index
    %2 = vector.load %arg4[%c0_2, %c0_3] : memref<2x256xf32, #tpu.memory_space<vmem>>, vector<1x256xf32>
    %c1 = arith.constant 1 : index
    %c0_4 = arith.constant 0 : index
    %3 = vector.load %arg4[%c1, %c0_4] : memref<2x256xf32, #tpu.memory_space<vmem>>, vector<1x256xf32>
    %4 = vector.extract_strided_slice %1 {offsets = [0, 0], sizes = [4, 256], strides = [1, 1]} : vector<4x290xf32> to vector<4x256xf32>
    %5 = vector.broadcast %2 : vector<1x256xf32> to vector<4x256xf32>
    %6 = arith.mulf %4, %5 : vector<4x256xf32>
    %7 = vector.extract_strided_slice %1 {offsets = [0, 1], sizes = [4, 256], strides = [1, 1]} : vector<4x290xf32> to vector<4x256xf32>
    %8 = vector.extract_strided_slice %1 {offsets = [0, 2], sizes = [4, 256], strides = [1, 1]} : vector<4x290xf32> to vector<4x256xf32>
    %9 = vector.broadcast %3 : vector<1x256xf32> to vector<4x256xf32>
    %10 = arith.mulf %8, %9 : vector<4x256xf32>
    %11 = vector.extract_strided_slice %1 {offsets = [0, 16], sizes = [4, 256], strides = [1, 1]} : vector<4x290xf32> to vector<4x256xf32>
    %12 = vector.broadcast %2 : vector<1x256xf32> to vector<4x256xf32>
    %13 = arith.mulf %11, %12 : vector<4x256xf32>
    %14 = vector.extract_strided_slice %1 {offsets = [0, 17], sizes = [4, 256], strides = [1, 1]} : vector<4x290xf32> to vector<4x256xf32>
    %15 = vector.extract_strided_slice %1 {offsets = [0, 18], sizes = [4, 256], strides = [1, 1]} : vector<4x290xf32> to vector<4x256xf32>
    %16 = vector.broadcast %3 : vector<1x256xf32> to vector<4x256xf32>
    %17 = arith.mulf %15, %16 : vector<4x256xf32>
    %18 = vector.extract_strided_slice %1 {offsets = [0, 32], sizes = [4, 256], strides = [1, 1]} : vector<4x290xf32> to vector<4x256xf32>
    %19 = vector.broadcast %2 : vector<1x256xf32> to vector<4x256xf32>
    %20 = arith.mulf %18, %19 : vector<4x256xf32>
    %21 = vector.extract_strided_slice %1 {offsets = [0, 33], sizes = [4, 256], strides = [1, 1]} : vector<4x290xf32> to vector<4x256xf32>
    %22 = vector.extract_strided_slice %1 {offsets = [0, 34], sizes = [4, 256], strides = [1, 1]} : vector<4x290xf32> to vector<4x256xf32>
    %23 = vector.broadcast %3 : vector<1x256xf32> to vector<4x256xf32>
    %24 = arith.mulf %22, %23 : vector<4x256xf32>
    %25 = tpu.concatenate %6, %7, %10, %13, %14, %17, %20, %21, %24 in 0 : vector<4x256xf32>, vector<4x256xf32>, vector<4x256xf32>, vector<4x256xf32>, vector<4x256xf32>, vector<4x256xf32>, vector<4x256xf32>, vector<4x256xf32>, vector<4x256xf32> -> vector<36x256xf32>
    %c0_5 = arith.constant 0 : index
    %c0_6 = arith.constant 0 : index
    %26 = vector.load %arg2[%c0_5, %c0_6] : memref<8x36xf32, #tpu.memory_space<vmem>>, vector<8x36xf32>
    %cst = arith.constant dense<0.000000e+00> : vector<8x256xf32>
    %27 = tpu.matmul %26, %25, %cst {dimension_numbers = #tpu.dot_dimension_numbers<[1], [0], [0], [1], [0, 0, 1, 1], [], []>} : vector<8x36xf32>, vector<36x256xf32>, vector<8x256xf32> -> vector<8x256xf32>
    %c0_7 = arith.constant 0 : index
    %c0_8 = arith.constant 0 : index
    %28 = vector.load %arg3[%c0_7, %c0_8] : memref<8x1xf32, #tpu.memory_space<vmem>>, vector<8x1xf32>
    %29 = vector.broadcast %28 : vector<8x1xf32> to vector<8x256xf32>
    %30 = arith.addf %27, %29 : vector<8x256xf32>
    %cst_9 = arith.constant 0.000000e+00 : f32
    %31 = vector.broadcast %cst_9 : f32 to vector<8x256xf32>
    %32 = arith.maximumf %30, %31 : vector<8x256xf32>
    %33 = vector.shape_cast %32 : vector<8x256xf32> to vector<1x8x256xf32>
    %c0_10 = arith.constant 0 : index
    %c0_11 = arith.constant 0 : index
    %c0_12 = arith.constant 0 : index
    %34 = vector.load %arg5[%c0_10, %c0_11, %c0_12] : memref<1x8x256xf32, #tpu.memory_space<vmem>>, vector<1x8x256xf32>
    tpu.vector_store %arg5[%c0_10, %c0_11, %c0_12], %33 {strides = array<i32>} : memref<1x8x256xf32, #tpu.memory_space<vmem>>, vector<1x8x256xf32>,
    return
  }
  func.func @transform_0(%arg0: i32) -> (i32, i32, i32) {
    %c0_i32 = arith.constant 0 : i32
    %c0_i32_0 = arith.constant 0 : i32
    %c0_i32_1 = arith.constant 0 : i32
    return %arg0, %c0_i32, %c0_i32_0 : i32, i32, i32
  }
  func.func @transform_1(%arg0: i32) -> (i32, i32) {
    %c0_i32 = arith.constant 0 : i32
    %c0_i32_0 = arith.constant 0 : i32
    %c0_i32_1 = arith.constant 0 : i32
    return %c0_i32, %c0_i32_0 : i32, i32
  }
  func.func @transform_2(%arg0: i32) -> (i32, i32) {
    %c0_i32 = arith.constant 0 : i32
    %c0_i32_0 = arith.constant 0 : i32
    %c0_i32_1 = arith.constant 0 : i32
    return %c0_i32, %c0_i32_0 : i32, i32
  }
  func.func @transform_3(%arg0: i32) -> (i32, i32) {
    %c0_i32 = arith.constant 0 : i32
    %c0_i32_0 = arith.constant 0 : i32
    %c0_i32_1 = arith.constant 0 : i32
    return %c0_i32, %c0_i32_0 : i32, i32
  }
  func.func @transform_4(%arg0: i32) -> (i32, i32, i32) {
    %c0_i32 = arith.constant 0 : i32
    %c0_i32_0 = arith.constant 0 : i32
    %c0_i32_1 = arith.constant 0 : i32
    return %arg0, %c0_i32, %c0_i32_0 : i32, i32, i32
  }
}

</mosaic_0001>

<llo_original>
// kernel: block_forward_nchw.1
$region0: #{block_forward_nchw.1}
  #allocation0 [shape = 'u32[]', space=smem, size = 0x4, offset = 0x4, fixed_abs, tag = 'smem constant byte address 0x4 - core index']
  #allocation1 [shape = 'u32[144,128]{1,0:T(1,128)}', space=vmem, size = 0x12000, scoped, tag = 'internal scratch']
  %s0 = inlined_call_operand.vmem [shape: f32[2,4,290], index: 0, kind: input, shape index: {}]
  %s1 = inlined_call_operand.vmem [shape: f32[8,36], index: 1, kind: input, shape index: {}]
  %s2 = inlined_call_operand.vmem [shape: f32[8,1], index: 2, kind: input, shape index: {}]
  %s3 = inlined_call_operand.vmem [shape: f32[2,256], index: 3, kind: input, shape index: {}]
  %s4 = inlined_call_operand.vmem [shape: f32[2,8,256], index: 4, kind: output, shape index: {}]
  %s5 = sld [smem:[#allocation0]]
  $region49: #{block_forward_nchw.1} parent=0
    _
  %s7 = ssub.s32 1, %s5
  %s8 = scalar_select 0, %s7, %s5
  loop: start=0, step=1, limit=4
  $region2: #{block_forward_nchw.1} parent=0 // loop_pre_header
    _
  $region3: #{block_forward_nchw.1} parent=0 // loop_header
    %s10 = sphi 0, %s14
    %p11 = scmp.ge.s32.totalorder %s10, 4
    %s20 = sphi 0, %s22
    %s23 = sphi 0, %s20
    %s24 = sphi 0, %s23
    %s40 = sphi 0, %s24
    %s44 = sphi 0, %s44
    %s46 = sphi 0, %s44
    %s47 = sphi 0, %s46
    %s61 = sphi 0, %s47
    %s65 = sphi 0, %s65
    %s67 = sphi 0, %s65
    %s68 = sphi 0, %s67
    %s82 = sphi 0, %s68
    %s86 = sphi 0, %s86
    %s88 = sphi 0, %s86
    %s89 = sphi 0, %s88
    %s103 = sphi 0, %s89
    %s109 = sphi 0, %s111
    %s112 = sphi 0, %s109
    %s113 = sphi 0, %s112
    %s129 = sphi 0, %s113
  $region4: #{block_forward_nchw.1} parent=0 // loop_header_branch
    %13 = sbr.rel (%p11) target = $region8
  $region5: #{block_forward_nchw.1} parent=0 // loop_body
    %s15 = ssub.s32 %s10, 1
    %s16 = ssub.s32 %s10, 2
    %s17 = sadd.s32 %s10, 1
    %s18 = ssub.s32 %s10, %s17
    %p19 = scmp.eq.s32.totalorder %s18, 0
    %s21 = sadd.s32 %s20, 1
    %s22 = scalar_select %p19, %s20, %s21
    %p25 = pneg %p19
    %p26 = scmp.eq.s32.totalorder %s10, 1
    %p27 = por %p25, %p26
    %p28 = scmp.ne.s32.totalorder %s20, %s23
    %p29 = scmp.eq.s32.totalorder %s10, 0
    %p30 = por %p28, %p29
    %p31 = scmp.ne.s32.totalorder %s20, %s23
    %p32 = scmp.eq.s32.totalorder %s15, 1
    %p33 = por %p31, %p32
    %p34 = scmp.ne.s32.totalorder %s23, %s24
    %p35 = scmp.eq.s32.totalorder %s15, 0
    %p36 = por %p34, %p35
    %p37 = scmp.ne.s32.totalorder %s23, %s24
    %p38 = scmp.eq.s32.totalorder %s16, 1
    %p39 = por %p37, %p38
    %p41 = scmp.ne.s32.totalorder %s24, %s40
    %p42 = scmp.eq.s32.totalorder %s16, 0
    %p43 = por %p41, %p42
    %s45 = sadd.s32 %s44, 1
    %p48 = scmp.eq.s32.totalorder %s10, 1
    %p49 = scmp.ne.s32.totalorder %s44, %s46
    %p50 = scmp.eq.s32.totalorder %s10, 0
    %p51 = por %p49, %p50
    %p52 = scmp.ne.s32.totalorder %s44, %s46
    %p53 = scmp.eq.s32.totalorder %s15, 1
    %p54 = por %p52, %p53
    %p55 = scmp.ne.s32.totalorder %s46, %s47
    %p56 = scmp.eq.s32.totalorder %s15, 0
    %p57 = por %p55, %p56
    %p58 = scmp.ne.s32.totalorder %s46, %s47
    %p59 = scmp.eq.s32.totalorder %s16, 1
    %p60 = por %p58, %p59
    %p62 = scmp.ne.s32.totalorder %s47, %s61
    %p63 = scmp.eq.s32.totalorder %s16, 0
    %p64 = por %p62, %p63
    %s66 = sadd.s32 %s65, 1
    %p69 = scmp.eq.s32.totalorder %s10, 1
    %p70 = scmp.ne.s32.totalorder %s65, %s67
    %p71 = scmp.eq.s32.totalorder %s10, 0
    %p72 = por %p70, %p71
    %p73 = scmp.ne.s32.totalorder %s65, %s67
    %p74 = scmp.eq.s32.totalorder %s15, 1
    %p75 = por %p73, %p74
    %p76 = scmp.ne.s32.totalorder %s67, %s68
    %p77 = scmp.eq.s32.totalorder %s15, 0
    %p78 = por %p76, %p77
    %p79 = scmp.ne.s32.totalorder %s67, %s68
    %p80 = scmp.eq.s32.totalorder %s16, 1
    %p81 = por %p79, %p80
    %p83 = scmp.ne.s32.totalorder %s68, %s82
    %p84 = scmp.eq.s32.totalorder %s16, 0
    %p85 = por %p83, %p84
    %s87 = sadd.s32 %s86, 1
    %p90 = scmp.eq.s32.totalorder %s10, 1
    %p91 = scmp.ne.s32.totalorder %s86, %s88
    %p92 = scmp.eq.s32.totalorder %s10, 0
    %p93 = por %p91, %p92
    %p94 = scmp.ne.s32.totalorder %s86, %s88
    %p95 = scmp.eq.s32.totalorder %s15, 1
    %p96 = por %p94, %p95
    %p97 = scmp.ne.s32.totalorder %s88, %s89
    %p98 = scmp.eq.s32.totalorder %s15, 0
    %p99 = por %p97, %p98
    %p100 = scmp.ne.s32.totalorder %s88, %s89
    %p101 = scmp.eq.s32.totalorder %s16, 1
    %p102 = por %p100, %p101
    %p104 = scmp.ne.s32.totalorder %s89, %s103
    %p105 = scmp.eq.s32.totalorder %s16, 0
    %p106 = por %p104, %p105
    %s107 = ssub.s32 %s10, %s17
    %p108 = scmp.eq.s32.totalorder %s107, 0
    %s110 = sadd.s32 %s109, 1
    %s111 = scalar_select %p108, %s109, %s110
    %p114 = pneg %p108
    %p115 = scmp.eq.s32.totalorder %s10, 1
    %p116 = por %p114, %p115
    %p117 = scmp.ne.s32.totalorder %s109, %s112
    %p118 = scmp.eq.s32.totalorder %s10, 0
    %p119 = por %p117, %p118
    %p120 = scmp.ne.s32.totalorder %s109, %s112
    %p121 = scmp.eq.s32.totalorder %s15, 1
    %p122 = por %p120, %p121
    %p123 = scmp.ne.s32.totalorder %s112, %s113
    %p124 = scmp.eq.s32.totalorder %s15, 0
    %p125 = por %p123, %p124
    %p126 = scmp.ne.s32.totalorder %s112, %s113
    %p127 = scmp.eq.s32.totalorder %s16, 1
    %p128 = por %p126, %p127
    %p130 = scmp.ne.s32.totalorder %s113, %s129
    %p131 = scmp.eq.s32.totalorder %s16, 0
    %p132 = por %p130, %p131
    %p133 = scmp.le.s32.totalorder 1, %s10
    %p134 = scmp.lt.s32.totalorder %s10, 3
    %p135 = pnand %p133, %p134
    %p136 = pneg %p135
    // Predicated region
    $region9: #{block_forward_nchw.1} parent=5 // pred_check
      _
    $region10: #{block_forward_nchw.1} parent=5 // pred_check_branch
      %138 = sbr.rel (%p135) target = $region12
    $region11: #{block_forward_nchw.1} parent=5 // pred_region
      %s139 = ssub.s32 %s10, 1
      // Predicated region
      $region13: #{block_forward_nchw.1} parent=11 // pred_check
        %p140 = pneg %p57
      $region14: #{block_forward_nchw.1} parent=11 // pred_check_branch
        %142 = sbr.rel (%p140) target = $region16
      $region15: #{block_forward_nchw.1} parent=11 // pred_region
        _
      $region16: #{block_forward_nchw.1} parent=11 // pred_fallthru
        _
      // Predicated region
      $region17: #{block_forward_nchw.1} parent=11 // pred_check
        %p143 = pneg %p78
      $region18: #{block_forward_nchw.1} parent=11 // pred_check_branch
        %145 = sbr.rel (%p143) target = $region20
      $region19: #{block_forward_nchw.1} parent=11 // pred_region
        _
      $region20: #{block_forward_nchw.1} parent=11 // pred_fallthru
        _
      // Predicated region
      $region21: #{block_forward_nchw.1} parent=11 // pred_check
        %p146 = pneg %p99
      $region22: #{block_forward_nchw.1} parent=11 // pred_check_branch
        %148 = sbr.rel (%p146) target = $region24
      $region23: #{block_forward_nchw.1} parent=11 // pred_region
        _
      $region24: #{block_forward_nchw.1} parent=11 // pred_fallthru
        _
    $region12: #{block_forward_nchw.1} parent=5 // pred_fallthru
      _
    %p149 = scmp.lt.s32.totalorder %s10, 2
    // Predicated region
    $region25: #{block_forward_nchw.1} parent=5 // pred_check
      %p150 = pneg %p149
    $region26: #{block_forward_nchw.1} parent=5 // pred_check_branch
      %152 = sbr.rel (%p150) target = $region28
    $region27: #{block_forward_nchw.1} parent=5 // pred_region
      // Predicated region
      $region29: #{block_forward_nchw.1} parent=27 // pred_check
        %p153 = pneg %p30
      $region30: #{block_forward_nchw.1} parent=27 // pred_check_branch
        %155 = sbr.rel (%p153) target = $region32
      $region31: #{block_forward_nchw.1} parent=27 // pred_region
        %p156 = scmp.lt.s32.totalorder %s10, 1
        %s157 = scalar_select %p156, %s10, 1
        %s158 = smul.addr %s157, 3
        %s159 = smul.addr %s158, 4
        %s160 = scalar_lea.vmem %s0, %s159
      $region32: #{block_forward_nchw.1} parent=27 // pred_fallthru
        _
    $region28: #{block_forward_nchw.1} parent=5 // pred_fallthru
      _
    %p161 = scmp.le.s32.totalorder 1, %s10
    %p162 = scmp.lt.s32.totalorder %s10, 3
    %p163 = pnand %p161, %p162
    %p164 = pneg %p163
    // Predicated region
    $region33: #{block_forward_nchw.1} parent=5 // pred_check
      _
    $region34: #{block_forward_nchw.1} parent=5 // pred_check_branch
      %166 = sbr.rel (%p163) target = $region36
    $region35: #{block_forward_nchw.1} parent=5 // pred_region
      %s167 = ssub.s32 %s10, 1
      %p168 = scmp.lt.s32.totalorder %s15, 1
      %s169 = scalar_select %p168, %s15, 1
      %s170 = smul.addr %s169, 3
      %s171 = smul.addr %s170, 4
      %s172 = scalar_lea.vmem %s0, %s171
      %p173 = pneg %p36
      %p174 = pneg %p33
      %p175 = pneg %p57
      %p176 = pneg %p54
      %p177 = pneg %p78
      %p178 = pneg %p75
      %p179 = pneg %p99
      %p180 = pneg %p96
      %p181 = pneg %p125
      %p182 = pneg %p122
      %p183 = scmp.lt.s32.totalorder %s15, 1
      %s184 = scalar_select %p183, %s15, 1
      %s185 = smul.addr %s184, 2
      %s186 = smul.addr %s185, 8
      %s187 = scalar_lea.vmem %s4, %s186
      %p188 = scmp.lt.s32.totalorder %s15, 1
      %s189 = scalar_select %p188, %s15, 1
      %s190 = smul.addr %s189, 3
      %s191 = smul.addr %s190, 4
      %s192 = scalar_lea.vmem %s0, %s191
      %p193 = scmp.lt.s32.totalorder %s15, 1
      %s194 = scalar_select %p193, %s15, 1
      %s195 = smul.addr %s194, 2
      %s196 = smul.addr %s195, 8
      %s197 = scalar_lea.vmem %s4, %s196
      %v198 = vld [vmem:[%s192] sm:$0xff]
      %v199 = vld [vmem:[%s192 + $0x8] sm:$0xf]
      %v200 = vld [vmem:[%s3] ss:$2 sm:$0x3]
      %s201 = scalar_lea.vmem %s3, 1
      %v202 = vld [vmem:[%s201] ss:$2 sm:$0x3]
      %v204 = vlaneseq
      %v205 = vshrl.u32 %v204, 7
      %v206 = vsub.s32 0, %v205
      %v207 = vrot.slane %v200, %v206
      %v208 = vlaneseq
      %v209 = vshrl.u32 %v208, 7
      %v210 = vsub.s32 1, %v209
      %v211 = vrot.slane %v200, %v210
      %v212 = vcombine.low %v207, %v211
      %v214 = vmul.f32 %v198, %v212
      %v216 = vlaneseq
      %v217 = vshrl.u32 %v216, 7
      %v218 = vsub.s32 0, %v217
      %v219 = vrot.slane %v202, %v218
      %v220 = vlaneseq
      %v221 = vshrl.u32 %v220, 7
      %v222 = vsub.s32 1, %v221
      %v223 = vrot.slane %v202, %v222
      %v224 = vcombine.low %v219, %v223
      %225 = vrot.lane.b32.xlu0 %v224, 2
      %v226 = vpop.permute.xlu0 %225
      %v227 = vrot.slane %v226, 4
      %vm228 = vcmask 15360
      %v229 = vsel %vm228, %v227, %v226
      %v232 = vmul.f32 %v198, %v229
      %v233 = vmul.f32 %v199, %v227
      %234 = vrot.lane.b32.xlu0 %v212, 16
      %v235 = vpop.permute.xlu0 %234
      %v236 = vrot.slane %v235, 4
      %vm237 = vcmask 130048
      %v238 = vsel %vm237, %v236, %v235
      %v241 = vmul.f32 %v198, %v238
      %v242 = vmul.f32 %v199, %v236
      %243 = vrot.lane.b32.xlu0 %v224, 18
      %v244 = vpop.permute.xlu0 %243
      %v245 = vrot.slane %v244, 4
      %vm246 = vcmask 146432
      %v247 = vsel %vm246, %v245, %v244
      %v250 = vmul.f32 %v198, %v247
      %v251 = vmul.f32 %v199, %v245
      %252 = vrot.lane.b32.xlu0 %v212, 32
      %v253 = vpop.permute.xlu0 %252
      %v254 = vrot.slane %v253, 4
      %vm255 = vcmask 261120
      %v256 = vsel %vm255, %v254, %v253
      %v259 = vmul.f32 %v198, %v256
      %v260 = vmul.f32 %v199, %v254
      %261 = vrot.lane.b32.xlu0 %v224, 34
      %v262 = vpop.permute.xlu0 %261
      %v263 = vrot.slane %v262, 4
      %vm264 = vcmask 277504
      %v265 = vsel %vm264, %v263, %v262
      %v268 = vmul.f32 %v198, %v265
      %v269 = vmul.f32 %v199, %v263
      %v271 = vcombine.high %v214, %v214
      %v275 = vcombine.low %v198, %v198
      %v276 = vcombine.low %v199, %v199
      %277 = vrot.lane.b32.xlu0 %v275, 127
      %v278 = vpop.permute.xlu0 %277
      %279 = vrot.lane.b32.xlu0 %v198, 127
      %v280 = vpop.permute.xlu0 %279
      %281 = vrot.lane.b32.xlu0 %v276, 127
      %v282 = vpop.permute.xlu0 %281
      %vm283 = vcmask 1039360
      %v284 = vsel %vm283, %v278, %v280
      %v285 = vsel %vm283, %v280, %v282
      %v290 = vcombine.high %v232, %v232
      %291 = vrot.lane.b32.xlu0 %v232, 126
      %v292 = vpop.permute.xlu0 %291
      %293 = vrot.lane.b32.xlu0 %v290, 126
      %v294 = vpop.permute.xlu0 %293
      %295 = vrot.lane.b32.xlu0 %v233, 126
      %v296 = vpop.permute.xlu0 %295
      %vm297 = vcmask 1031168
      %v298 = vsel %vm297, %v292, %v294
      %v299 = vsel %vm297, %v294, %v296
      %v304 = vcombine.low %v241, %v241
      %v305 = vcombine.low %v242, %v242
      %306 = vrot.lane.b32.xlu0 %v304, 112
      %v307 = vpop.permute.xlu0 %306
      %308 = vrot.lane.b32.xlu0 %v241, 112
      %v309 = vpop.permute.xlu0 %308
      %310 = vrot.lane.b32.xlu0 %v305, 112
      %v311 = vpop.permute.xlu0 %310
      %vm312 = vcmask 916480
      %v313 = vsel %vm312, %v307, %v309
      %v314 = vsel %vm312, %v309, %v311
      %v317 = vcombine.high %v198, %v198
      %318 = vrot.lane.b32.xlu0 %v198, 111
      %v319 = vpop.permute.xlu0 %318
      %320 = vrot.lane.b32.xlu0 %v317, 111
      %v321 = vpop.permute.xlu0 %320
      %322 = vrot.lane.b32.xlu0 %v199, 111
      %v323 = vpop.permute.xlu0 %322
      %vm324 = vcmask 908288
      %v325 = vsel %vm324, %v319, %v321
      %v326 = vsel %vm324, %v321, %v323
      %v331 = vcombine.low %v250, %v250
      %v332 = vcombine.low %v251, %v251
      %333 = vrot.lane.b32.xlu0 %v331, 110
      %v334 = vpop.permute.xlu0 %333
      %335 = vrot.lane.b32.xlu0 %v250, 110
      %v336 = vpop.permute.xlu0 %335
      %337 = vrot.lane.b32.xlu0 %v332, 110
      %v338 = vpop.permute.xlu0 %337
      %vm339 = vcmask 900096
      %v340 = vsel %vm339, %v334, %v336
      %v341 = vsel %vm339, %v336, %v338
      %v346 = vcombine.high %v259, %v259
      %347 = vrot.lane.b32.xlu0 %v259, 96
      %v348 = vpop.permute.xlu0 %347
      %349 = vrot.lane.b32.xlu0 %v346, 96
      %v350 = vpop.permute.xlu0 %349
      %351 = vrot.lane.b32.xlu0 %v260, 96
      %v352 = vpop.permute.xlu0 %351
      %vm353 = vcmask 785408
      %v354 = vsel %vm353, %v348, %v350
      %v355 = vsel %vm353, %v350, %v352
      %358 = vrot.lane.b32.xlu0 %v275, 95
      %v359 = vpop.permute.xlu0 %358
      %360 = vrot.lane.b32.xlu0 %v198, 95
      %v361 = vpop.permute.xlu0 %360
      %362 = vrot.lane.b32.xlu0 %v276, 95
      %v363 = vpop.permute.xlu0 %362
      %vm364 = vcmask 777216
      %v365 = vsel %vm364, %v359, %v361
      %v366 = vsel %vm364, %v361, %v363
      %v371 = vcombine.high %v268, %v268
      %372 = vrot.lane.b32.xlu0 %v268, 94
      %v373 = vpop.permute.xlu0 %372
      %374 = vrot.lane.b32.xlu0 %v371, 94
      %v375 = vpop.permute.xlu0 %374
      %376 = vrot.lane.b32.xlu0 %v269, 94
      %v377 = vpop.permute.xlu0 %376
      %vm378 = vcmask 769024
      %v379 = vsel %vm378, %v373, %v375
      %v380 = vsel %vm378, %v375, %v377
      %vm381 = vcmask 1043456
      %v382 = vsel %vm381, %v214, %v284
      %v383 = vsel %vm381, %v271, %v285
      %v384 = vsel %vm381, %v298, %v313
      %v385 = vsel %vm381, %v299, %v314
      %v386 = vsel %vm381, %v325, %v340
      %v387 = vsel %vm381, %v326, %v341
      %v388 = vsel %vm381, %v354, %v365
      %v389 = vsel %vm381, %v355, %v366
      %v390 = vld [vmem:[%s1] sm:$0xff]
      %v391 = vld [vmem:[%s2] sm:$0xff]
      %393 = vset.pattern.permute.xlu0 0
      %394 = vperm.xlu0 %393, %v391
      %v395 = vpop.permute.xlu0 %394
      %vm397 = vcmask 293888
      %v399 = vsel %vm397, %v390, 0
      %v401 = vsel %vm381, %v379, 0
      %v403 = vsel %vm381, %v380, 0
      %405 = vmatprep.subr.mxu0 %v383
      %406 = vmatpush1.msra.mxu0 %v382
      %407 = vmatprep.subr.mxu0 %v385
      %408 = vmatpush1.msra.mxu0 %v384
      %409 = vmatprep.subr.mxu0 %v387
      %410 = vmatpush1.msra.mxu0 %v386
      %411 = vmatprep.subr.mxu0 %v389
      %412 = vmatpush1.msra.mxu0 %v388
      %413 = vmatprep.subr.mxu0 %v403
      %414 = vmatpush1.msra.mxu0 %v401
      %415 = vmatprep.subr.mxu0 0.0
      %416 = vmatpush1.msra.mxu0 0.0
      %417 = vmatprep.subr.mxu0 0.0
      %418 = vmatpush1.msra.mxu0 0.0
      %419 = vmatprep.subr.mxu0 0.0
      %420 = vmatpush1.msra.mxu0 0.0
      %421 = vmatprep.subr.mxu0 0.0
      %422 = vmatpush1.msra.mxu0 0.0
      %423 = vmatprep.subr.mxu0 0.0
      %424 = vmatpush1.msra.mxu0 0.0
      %425 = vmatprep.subr.mxu0 0.0
      %426 = vmatpush1.msra.mxu0 0.0
      %427 = vmatprep.subr.mxu0 0.0
      %428 = vmatpush1.msra.mxu0 0.0
      %429 = vmatprep.subr.mxu0 0.0
      %430 = vmatpush1.msra.mxu0 0.0
      %431 = vmatprep.subr.mxu0 0.0
      %432 = vmatpush1.msra.mxu0 0.0
      %433 = vmatprep.subr.mxu0 0.0
      %434 = vmatpush1.msra.mxu0 0.0
      %435 = vmatprep.subr.mxu0 0.0
      %436 = vmatpush1.msra.mxu0 0.0
      %437 = vmatprep.subr.mxu0 0.0
      %438 = vmatpush1.msra.mxu0 0.0
      %439 = vmatprep.subr.mxu0 0.0
      %440 = vmatpush1.msra.mxu0 0.0
      %441 = vmatprep.subr.mxu0 0.0
      %442 = vmatpush1.msra.mxu0 0.0
      %443 = vmatprep.subr.mxu0 0.0
      %444 = vmatpush1.msra.mxu0 0.0
      %445 = vmatprep.subr.mxu0 0.0
      %446 = vmatpush1.msra.mxu0 0.0
      %447 = vmatprep.subr.mxu0 0.0
      %448 = vmatpush1.msra.mxu0 0.0
      %449 = vmatprep.subr.mxu0 0.0
      %450 = vmatpush1.msra.mxu0 0.0
      %451 = vmatprep.subr.mxu0 0.0
      %452 = vmatpush1.msra.mxu0 0.0
      %453 = vmatprep.subr.mxu0 0.0
      %454 = vmatpush1.msra.mxu0 0.0
      %455 = vmatprep.subr.mxu0 0.0
      %456 = vmatpush1.msra.mxu0 0.0
      %457 = vmatprep.subr.mxu0 0.0
      %458 = vmatpush1.msra.mxu0 0.0
      %459 = vmatprep.subr.mxu0 0.0
      %460 = vmatpush1.msra.mxu0 0.0
      %461 = vmatprep.subr.mxu0 0.0
      %462 = vmatpush1.msra.mxu0 0.0
      %463 = vmatprep.subr.mxu0 0.0
      %464 = vmatpush1.msra.mxu0 0.0
      %465 = vmatprep.subr.mxu0 0.0
      %466 = vmatpush1.msra.mxu0 0.0
      %467 = vmatprep.subr.mxu0 0.0
      %468 = vmatpush1.msra.mxu0 0.0
      %469 = vmatprep.mubr.f32.mxu0 0.0
      %470 = vmatmul.mubr.f32.gmra.mrb[0].mxu0 %v399
      %v471 = vpop.f32.mrb[0].mxu0
      %v472 = vadd.f32 %v395, %v471
      %v473 = vpop.f32.mrb[0].mxu0
      %v474 = vadd.f32 %v395, %v473
      %475 = vdwg.mxu0
      %v476 = vmax.f32 %v472, 0.0
      %v477 = vmax.f32 %v474, 0.0
      %478 = vst [vmem:[%s197] sm:$0xff] %v476
      %479 = vst [vmem:[%s197 + $0x8] sm:$0xff] %v477
      %p480 = scmp.lt.s32.totalorder %s15, 1
      %s481 = scalar_select %p480, %s15, 1
      %s482 = smul.addr %s481, 2
      %s483 = smul.addr %s482, 8
      %s484 = scalar_lea.vmem %s4, %s483
      // Predicated region
      $region37: #{block_forward_nchw.1} parent=35 // pred_check
        %p485 = pneg %p122
      $region38: #{block_forward_nchw.1} parent=35 // pred_check_branch
        %487 = sbr.rel (%p485) target = $region40
      $region39: #{block_forward_nchw.1} parent=35 // pred_region
        _
      $region40: #{block_forward_nchw.1} parent=35 // pred_fallthru
        _
    $region36: #{block_forward_nchw.1} parent=5 // pred_fallthru
      _
    %p488 = scmp.le.s32.totalorder 2, %s10
    // Predicated region
    $region41: #{block_forward_nchw.1} parent=5 // pred_check
      %p489 = pneg %p488
    $region42: #{block_forward_nchw.1} parent=5 // pred_check_branch
      %491 = sbr.rel (%p489) target = $region44
    $region43: #{block_forward_nchw.1} parent=5 // pred_region
      %s492 = ssub.s32 %s10, 2
      // Predicated region
      $region45: #{block_forward_nchw.1} parent=43 // pred_check
        %p493 = pneg %p128
      $region46: #{block_forward_nchw.1} parent=43 // pred_check_branch
        %495 = sbr.rel (%p493) target = $region48
      $region47: #{block_forward_nchw.1} parent=43 // pred_region
        %p496 = scmp.lt.s32.totalorder %s16, 1
        %s497 = scalar_select %p496, %s16, 1
        %s498 = smul.addr %s497, 2
        %s499 = smul.addr %s498, 8
        %s500 = scalar_lea.vmem %s4, %s499
      $region48: #{block_forward_nchw.1} parent=43 // pred_fallthru
        _
    $region44: #{block_forward_nchw.1} parent=5 // pred_fallthru
      _
  $region6: #{block_forward_nchw.1} parent=0 // loop_footer
    %s14 = sadd.s32 1, %s10
  $region7: #{block_forward_nchw.1} parent=0 // loop_footer_branch
    %9 = sbr.rel target = $region3
  $region8: #{block_forward_nchw.1} parent=0 // loop_exit
    _

</llo_original>
